<compile_context>
chip_gen: v5e
topology: v5e:2x2
jax: 0.10.0
libtpu: 0.0.40
codegen_flags: <defaults>
</compile_context>

<pallas_src>
import jax
import jax.numpy as jnp
from jax.experimental import pallas as pl
from jax.experimental.pallas import tpu as pltpu

C, H, W = 3, 16, 16
HW = H * W                                  # 256 -> lane-dense

# torchvision rgb_to_grayscale weights
_GRAY_R, _GRAY_G, _GRAY_B = 0.2989, 0.587, 0.114


def _preproc_kernel(params_ref, x_ref, o_ref):
    # params_ref: SMEM f32[B, 12], per image:
    #   [0] brightness  [1] contrast  [2] saturation
    #   [3:6]  a_c = w_side * inv_std_c   (blur side tap fused with Normalize)
    #   [6:9]  b_c = w_mid  * inv_std_c   (blur centre tap fused with Normalize)
    #   [9:12] c_c = mean_c * inv_std_c
    # x_ref / o_ref: VMEM f32[1, C, H*W]  (one image per grid step).
    i = pl.program_id(0)
    x = x_ref[0]                                     # (C, HW), f32 in [0, 1]
    b = params_ref[i, 0]
    c = params_ref[i, 1]
    s = params_ref[i, 2]

    # --- ColorJitter(0.3,0.3,0.3); fixed order brightness -> contrast -> saturation ---
    x = jnp.clip(x * b, 0.0, 1.0)                                        # adjust_brightness
    gray = _GRAY_R * x[0:1] + _GRAY_G * x[1:2] + _GRAY_B * x[2:3]        # (1, HW)
    x = jnp.clip(c * x + (1.0 - c) * jnp.mean(gray), 0.0, 1.0)           # adjust_contrast
    gray = _GRAY_R * x[0:1] + _GRAY_G * x[1:2] + _GRAY_B * x[2:3]
    x = jnp.clip(s * x + (1.0 - s) * gray, 0.0, 1.0)                     # adjust_saturation

    # --- GaussianBlur(kernel_size=(1, 3)): 3-tap blur along H (stride W in the
    #     flattened lane axis), reflect padding.  Shifts go through the XLU. ---
    xm = pltpu.roll(x, W, 1)                  # row h-1 (circular)
    xp = pltpu.roll(x, HW - W, 1)             # row h+1 (circular)
    lane = jax.lax.broadcasted_iota(jnp.int32, (C, HW), 1)
    xm_f = jnp.where(lane < W, xp, xm)                # reflect: row -1 -> row 1
    xp_f = jnp.where(lane >= HW - W, xm, xp)          # reflect: row H  -> row H-2

    # Per-channel fused blur+Normalize coefficients as (C, 1) columns.
    sub = jax.lax.broadcasted_iota(jnp.int32, (C, 1), 0)

    def _per_channel(k0):
        return jnp.where(sub == 0, params_ref[i, k0],
                         jnp.where(sub == 1, params_ref[i, k0 + 1],
                                   params_ref[i, k0 + 2]))

    a_c = _per_channel(3)
    b_c = _per_channel(6)
    c_c = _per_channel(9)

    # Blur + Normalize in a single full-tile, lane-dense store.
    o_ref[0] = a_c * (xm_f + xp_f) + b_c * x - c_c


def train_preprocess(imgs, params):
    """imgs: (B, C, H*W) f32 in [0,1]; params: (B, 12) f32. Returns (B, C, H*W)."""
    B = imgs.shape[0]
    return pl.pallas_call(
        _preproc_kernel,
        out_shape=jax.ShapeDtypeStruct((B, C, HW), jnp.float32),
        grid=(B,),
        in_specs=[
            pl.BlockSpec(memory_space=pltpu.SMEM),               # per-image params
            pl.BlockSpec((1, C, HW), lambda i: (i, 0, 0)),        # one image / step
        ],
        out_specs=pl.BlockSpec((1, C, HW), lambda i: (i, 0, 0)),
        compiler_params=pltpu.CompilerParams(
            dimension_semantics=("parallel",)),                  # v7x: split batch across TCs
    )(params, imgs)


@jax.jit
def preprocess_batch(raw, crop_offs, params):
    """Glue in one jit: random crop -> flatten (lane-dense) -> Pallas kernel."""
    # TODO(synk): fuse the crop directly into the kernel's input index_map
    #             (pl.Element offsets from scalar prefetch) to drop this extra pass.
    def _crop(img, off):
        return jax.lax.dynamic_slice(img, (jnp.int32(0), off[0], off[1]), (C, H, W))

    imgs = jax.vmap(_crop)(raw, crop_offs)                        # (B, C, H, W)
    return train_preprocess(imgs.reshape(-1, C, HW), params)


def _reference(imgs, bri, con, sat, w_side, w_mid, mean, inv_std):
    """Pure-JAX reference of the kernel math (for correctness check)."""
    x = jnp.clip(imgs * bri[:, None, None, None], 0.0, 1.0)
    gray = _GRAY_R * x[:, 0] + _GRAY_G * x[:, 1] + _GRAY_B * x[:, 2]
    gmean = gray.mean(axis=(1, 2))[:, None, None, None]
    x = jnp.clip(con[:, None, None, None] * x + (1 - con[:, None, None, None]) * gmean, 0.0, 1.0)
    gray = _GRAY_R * x[:, 0] + _GRAY_G * x[:, 1] + _GRAY_B * x[:, 2]
    x = jnp.clip(sat[:, None, None, None] * x + (1 - sat[:, None, None, None]) * gray[:, None], 0.0, 1.0)
    xm = jnp.concatenate([x[:, :, 1:2], x[:, :, :-1]], axis=2)
    xp = jnp.concatenate([x[:, :, 1:], x[:, :, H - 2:H - 1]], axis=2)
    y = w_side[:, None, None, None] * (xm + xp) + w_mid[:, None, None, None] * x
    return (y - mean[None, :, None, None]) * inv_std[None, :, None, None]


if __name__ == "__main__":
    B = 8
    key = jax.random.PRNGKey(0)
    k_img, k_ij, k_b, k_c, k_s, k_sig = jax.random.split(key, 6)

    # Raw images already in ToTensor layout (CHW f32 in [0,1]), slightly larger
    # so the random crop window (h=H, w=W here) has room.
    raw = jax.random.uniform(k_img, (B, C, H + 2, W + 2), dtype=jnp.float32)

    # ---- host-side "random" draws (glue) ----
    crop_offs = jax.random.randint(k_ij, (B, 2), 0, 3)                    # crop (i, j)
    bri = jax.random.uniform(k_b, (B,), minval=0.7, maxval=1.3)           # ColorJitter(0.3,...)
    con = jax.random.uniform(k_c, (B,), minval=0.7, maxval=1.3)
    sat = jax.random.uniform(k_s, (B,), minval=0.7, maxval=1.3)
    sigma = jax.random.uniform(k_sig, (B,), minval=0.1, maxval=2.0)       # GaussianBlur sigma
    # resize_image = nn.Identity() (img_size=None); h_flip_p = v_flip_p = 0.0 -> never flipped.
    # TODO(synk): RandomPerspective(distortion_scale=0.2, p=0.2) warp not implemented;
    #             the deterministic coin flip falls in the 80% "not applied" branch.
    # TODO(synk): torchvision ColorJitter permutes the b/c/s op order per sample; fixed here.

    g = jnp.exp(-0.5 / (sigma * sigma))
    w_side = g / (1.0 + 2.0 * g)
    w_mid = 1.0 / (1.0 + 2.0 * g)
    mean = jnp.array([0.485, 0.456, 0.406], jnp.float32)
    inv_std = 1.0 / jnp.array([0.229, 0.224, 0.225], jnp.float32)

    # Per-image params with Normalize folded into the blur tap weights.
    params = jnp.concatenate([
        jnp.stack([bri, con, sat], axis=1),
        w_side[:, None] * inv_std[None, :],
        w_mid[:, None] * inv_std[None, :],
        jnp.broadcast_to((mean * inv_std)[None, :], (B, 3)),
    ], axis=1).astype(jnp.float32)                                        # (B, 12)

    out = jax.block_until_ready(preprocess_batch(raw, crop_offs, params))

    imgs = jax.vmap(lambda im, o: jax.lax.dynamic_slice(
        im, (jnp.int32(0), o[0], o[1]), (C, H, W)))(raw, crop_offs)
    ref = _reference(imgs, bri, con, sat, w_side, w_mid, mean, inv_std)

    assert out.shape == (B, C, HW) and out.dtype == jnp.float32
    assert jnp.allclose(out.reshape(B, C, H, W), ref, atol=1e-5, rtol=1e-5)
    print("KERNEL_OK")
</pallas_src>

<mosaic_0001>
module attributes {stable_mosaic.version = 11 : i64} {
  func.func @_preproc_kernel(%arg0: i32, %arg1: memref<8x12xf32, #tpu.memory_space<smem>>, %arg2: memref<1x3x256xf32, #tpu.memory_space<vmem>>, %arg3: memref<1x3x256xf32, #tpu.memory_space<vmem>>) attributes {dimension_semantics = [#tpu.dimension_semantics<parallel>], iteration_bounds = array<i64: 8>, scalar_prefetch = 0 : i64, scratch_operands = 0 : i64, tpu.core_type = #tpu.core_type<tc>, window_params = [{transform_indices = @transform_0, window_bounds = array<i64: 8, 12>}, {transform_indices = @transform_1, window_bounds = array<i64: 1, 3, 256>}, {transform_indices = @transform_2, window_bounds = array<i64: 1, 3, 256>}]} {
    %c0 = arith.constant 0 : index
    %c0_0 = arith.constant 0 : index
    %c0_1 = arith.constant 0 : index
    %0 = vector.load %arg2[%c0, %c0_0, %c0_1] : memref<1x3x256xf32, #tpu.memory_space<vmem>>, vector<1x3x256xf32>
    %1 = vector.shape_cast %0 : vector<1x3x256xf32> to vector<3x256xf32>
    %2 = arith.index_cast %arg0 : i32 to index
    %c0_2 = arith.constant 0 : index
    %3 = memref.load %arg1[%2, %c0_2] : memref<8x12xf32, #tpu.memory_space<smem>>
    %4 = arith.index_cast %arg0 : i32 to index
    %c1 = arith.constant 1 : index
    %5 = memref.load %arg1[%4, %c1] : memref<8x12xf32, #tpu.memory_space<smem>>
    %6 = arith.index_cast %arg0 : i32 to index
    %c2 = arith.constant 2 : index
    %7 = memref.load %arg1[%6, %c2] : memref<8x12xf32, #tpu.memory_space<smem>>
    %8 = vector.broadcast %3 : f32 to vector<3x256xf32>
    %9 = arith.mulf %1, %8 : vector<3x256xf32>
    %cst = arith.constant 0.000000e+00 : f32
    %cst_3 = arith.constant 1.000000e+00 : f32
    %10 = vector.broadcast %cst : f32 to vector<3x256xf32>
    %11 = arith.maximumf %10, %9 : vector<3x256xf32>
    %12 = vector.broadcast %cst_3 : f32 to vector<3x256xf32>
    %13 = arith.minimumf %12, %11 : vector<3x256xf32>
    %14 = vector.extract_strided_slice %13 {offsets = [0, 0], sizes = [1, 256], strides = [1, 1]} : vector<3x256xf32> to vector<1x256xf32>
    %cst_4 = arith.constant 2.989000e-01 : f32
    %15 = vector.broadcast %cst_4 : f32 to vector<1x256xf32>
    %16 = arith.mulf %15, %14 : vector<1x256xf32>
    %17 = vector.extract_strided_slice %13 {offsets = [1, 0], sizes = [1, 256], strides = [1, 1]} : vector<3x256xf32> to vector<1x256xf32>
    %cst_5 = arith.constant 5.870000e-01 : f32
    %18 = vector.broadcast %cst_5 : f32 to vector<1x256xf32>
    %19 = arith.mulf %18, %17 : vector<1x256xf32>
    %20 = arith.addf %16, %19 : vector<1x256xf32>
    %21 = vector.extract_strided_slice %13 {offsets = [2, 0], sizes = [1, 256], strides = [1, 1]} : vector<3x256xf32> to vector<1x256xf32>
    %cst_6 = arith.constant 1.140000e-01 : f32
    %22 = vector.broadcast %cst_6 : f32 to vector<1x256xf32>
    %23 = arith.mulf %22, %21 : vector<1x256xf32>
    %24 = arith.addf %20, %23 : vector<1x256xf32>
    %25 = vector.broadcast %5 : f32 to vector<3x256xf32>
    %26 = arith.mulf %25, %13 : vector<3x256xf32>
    %cst_7 = arith.constant 1.000000e+00 : f32
    %27 = arith.subf %cst_7, %5 : f32
    %28 = vector.shape_cast %24 : vector<1x256xf32> to vector<1x1x256xf32>
    %cst_8 = arith.constant dense<0.000000e+00> : vector<1xf32>
    %29 = vector.multi_reduction <add>, %28, %cst_8 [1, 2] : vector<1x1x256xf32> to vector<1xf32>
    %30 = vector.shape_cast %29 : vector<1xf32> to vector<1x1x1xf32>
    %31 = vector.extract %30[0, 0, 0] : f32 from vector<1x1x1xf32>
    %cst_9 = arith.constant 2.560000e+02 : f32
    %32 = arith.divf %31, %cst_9 : f32
    %33 = arith.mulf %27, %32 : f32
    %34 = vector.broadcast %33 : f32 to vector<3x256xf32>
    %35 = arith.addf %26, %34 : vector<3x256xf32>
    %cst_10 = arith.constant 0.000000e+00 : f32
    %cst_11 = arith.constant 1.000000e+00 : f32
    %36 = vector.broadcast %cst_10 : f32 to vector<3x256xf32>
    %37 = arith.maximumf %36, %35 : vector<3x256xf32>
    %38 = vector.broadcast %cst_11 : f32 to vector<3x256xf32>
    %39 = arith.minimumf %38, %37 : vector<3x256xf32>
    %40 = vector.extract_strided_slice %39 {offsets = [0, 0], sizes = [1, 256], strides = [1, 1]} : vector<3x256xf32> to vector<1x256xf32>
    %cst_12 = arith.constant 2.989000e-01 : f32
    %41 = vector.broadcast %cst_12 : f32 to vector<1x256xf32>
    %42 = arith.mulf %41, %40 : vector<1x256xf32>
    %43 = vector.extract_strided_slice %39 {offsets = [1, 0], sizes = [1, 256], strides = [1, 1]} : vector<3x256xf32> to vector<1x256xf32>
    %cst_13 = arith.constant 5.870000e-01 : f32
    %44 = vector.broadcast %cst_13 : f32 to vector<1x256xf32>
    %45 = arith.mulf %44, %43 : vector<1x256xf32>
    %46 = arith.addf %42, %45 : vector<1x256xf32>
    %47 = vector.extract_strided_slice %39 {offsets = [2, 0], sizes = [1, 256], strides = [1, 1]} : vector<3x256xf32> to vector<1x256xf32>
    %cst_14 = arith.constant 1.140000e-01 : f32
    %48 = vector.broadcast %cst_14 : f32 to vector<1x256xf32>
    %49 = arith.mulf %48, %47 : vector<1x256xf32>
    %50 = arith.addf %46, %49 : vector<1x256xf32>
    %51 = vector.broadcast %7 : f32 to vector<3x256xf32>
    %52 = arith.mulf %51, %39 : vector<3x256xf32>
    %cst_15 = arith.constant 1.000000e+00 : f32
    %53 = arith.subf %cst_15, %7 : f32
    %54 = vector.broadcast %53 : f32 to vector<1x256xf32>
    %55 = arith.mulf %54, %50 : vector<1x256xf32>
    %56 = vector.broadcast %55 : vector<1x256xf32> to vector<3x256xf32>
    %57 = arith.addf %52, %56 : vector<3x256xf32>
    %cst_16 = arith.constant 0.000000e+00 : f32
    %cst_17 = arith.constant 1.000000e+00 : f32
    %58 = vector.broadcast %cst_16 : f32 to vector<3x256xf32>
    %59 = arith.maximumf %58, %57 : vector<3x256xf32>
    %60 = vector.broadcast %cst_17 : f32 to vector<3x256xf32>
    %61 = arith.minimumf %60, %59 : vector<3x256xf32>
    %c16_i32 = arith.constant 16 : i32
    %62 = tpu.dynamic_rotate %61 by %c16_i32 dim 1 : vector<3x256xf32>, i32 -> vector<3x256xf32>
    %c240_i32 = arith.constant 240 : i32
    %63 = tpu.dynamic_rotate %61 by %c240_i32 dim 1 : vector<3x256xf32>, i32 -> vector<3x256xf32>
    %64 = tpu.iota {dimensions = array<i32: 1>} : vector<3x256xi32>
    %c16_i32_18 = arith.constant 16 : i32
    %65 = vector.broadcast %c16_i32_18 : i32 to vector<3x256xi32>
    %66 = arith.cmpi slt, %64, %65 : vector<3x256xi32>
    %67 = arith.select %66, %63, %62 : vector<3x256xi1>, vector<3x256xf32>
    %c240_i32_19 = arith.constant 240 : i32
    %68 = vector.broadcast %c240_i32_19 : i32 to vector<3x256xi32>
    %69 = arith.cmpi sge, %64, %68 : vector<3x256xi32>
    %70 = arith.select %69, %62, %63 : vector<3x256xi1>, vector<3x256xf32>
    %71 = tpu.iota {dimensions = array<i32: 0>} : vector<3x1xi32>
    %c0_i32 = arith.constant 0 : i32
    %72 = vector.broadcast %c0_i32 : i32 to vector<3x1xi32>
    %73 = arith.cmpi eq, %71, %72 : vector<3x1xi32>
    %74 = arith.index_cast %arg0 : i32 to index
    %c3 = arith.constant 3 : index
    %75 = memref.load %arg1[%74, %c3] : memref<8x12xf32, #tpu.memory_space<smem>>
    %c1_i32 = arith.constant 1 : i32
    %76 = vector.broadcast %c1_i32 : i32 to vector<3x1xi32>
    %77 = arith.cmpi eq, %71, %76 : vector<3x1xi32>
    %78 = arith.index_cast %arg0 : i32 to index
    %c4 = arith.constant 4 : index
    %79 = memref.load %arg1[%78, %c4] : memref<8x12xf32, #tpu.memory_space<smem>>
    %80 = arith.index_cast %arg0 : i32 to index
    %c5 = arith.constant 5 : index
    %81 = memref.load %arg1[%80, %c5] : memref<8x12xf32, #tpu.memory_space<smem>>
    %82 = vector.broadcast %79 : f32 to vector<3x1xf32>
    %83 = vector.broadcast %81 : f32 to vector<3x1xf32>
    %84 = arith.select %77, %82, %83 : vector<3x1xi1>, vector<3x1xf32>
    %85 = vector.broadcast %75 : f32 to vector<3x1xf32>
    %86 = arith.select %73, %85, %84 : vector<3x1xi1>, vector<3x1xf32>
    %c0_i32_20 = arith.constant 0 : i32
    %87 = vector.broadcast %c0_i32_20 : i32 to vector<3x1xi32>
    %88 = arith.cmpi eq, %71, %87 : vector<3x1xi32>
    %89 = arith.index_cast %arg0 : i32 to index
    %c6 = arith.constant 6 : index
    %90 = memref.load %arg1[%89, %c6] : memref<8x12xf32, #tpu.memory_space<smem>>
    %c1_i32_21 = arith.constant 1 : i32
    %91 = vector.broadcast %c1_i32_21 : i32 to vector<3x1xi32>
    %92 = arith.cmpi eq, %71, %91 : vector<3x1xi32>
    %93 = arith.index_cast %arg0 : i32 to index
    %c7 = arith.constant 7 : index
    %94 = memref.load %arg1[%93, %c7] : memref<8x12xf32, #tpu.memory_space<smem>>
    %95 = arith.index_cast %arg0 : i32 to index
    %c8 = arith.constant 8 : index
    %96 = memref.load %arg1[%95, %c8] : memref<8x12xf32, #tpu.memory_space<smem>>
    %97 = vector.broadcast %94 : f32 to vector<3x1xf32>
    %98 = vector.broadcast %96 : f32 to vector<3x1xf32>
    %99 = arith.select %92, %97, %98 : vector<3x1xi1>, vector<3x1xf32>
    %100 = vector.broadcast %90 : f32 to vector<3x1xf32>
    %101 = arith.select %88, %100, %99 : vector<3x1xi1>, vector<3x1xf32>
    %c0_i32_22 = arith.constant 0 : i32
    %102 = vector.broadcast %c0_i32_22 : i32 to vector<3x1xi32>
    %103 = arith.cmpi eq, %71, %102 : vector<3x1xi32>
    %104 = arith.index_cast %arg0 : i32 to index
    %c9 = arith.constant 9 : index
    %105 = memref.load %arg1[%104, %c9] : memref<8x12xf32, #tpu.memory_space<smem>>
    %c1_i32_23 = arith.constant 1 : i32
    %106 = vector.broadcast %c1_i32_23 : i32 to vector<3x1xi32>
    %107 = arith.cmpi eq, %71, %106 : vector<3x1xi32>
    %108 = arith.index_cast %arg0 : i32 to index
    %c10 = arith.constant 10 : index
    %109 = memref.load %arg1[%108, %c10] : memref<8x12xf32, #tpu.memory_space<smem>>
    %110 = arith.index_cast %arg0 : i32 to index
    %c11 = arith.constant 11 : index
    %111 = memref.load %arg1[%110, %c11] : memref<8x12xf32, #tpu.memory_space<smem>>
    %112 = vector.broadcast %109 : f32 to vector<3x1xf32>
    %113 = vector.broadcast %111 : f32 to vector<3x1xf32>
    %114 = arith.select %107, %112, %113 : vector<3x1xi1>, vector<3x1xf32>
    %115 = vector.broadcast %105 : f32 to vector<3x1xf32>
    %116 = arith.select %103, %115, %114 : vector<3x1xi1>, vector<3x1xf32>
    %117 = arith.addf %67, %70 : vector<3x256xf32>
    %118 = vector.broadcast %86 : vector<3x1xf32> to vector<3x256xf32>
    %119 = arith.mulf %118, %117 : vector<3x256xf32>
    %120 = vector.broadcast %101 : vector<3x1xf32> to vector<3x256xf32>
    %121 = arith.mulf %120, %61 : vector<3x256xf32>
    %122 = arith.addf %119, %121 : vector<3x256xf32>
    %123 = vector.broadcast %116 : vector<3x1xf32> to vector<3x256xf32>
    %124 = arith.subf %122, %123 : vector<3x256xf32>
    %c0_24 = arith.constant 0 : index
    %c0_25 = arith.constant 0 : index
    %c0_26 = arith.constant 0 : index
    %125 = vector.load %arg3[%c0_24, %c0_25, %c0_26] : memref<1x3x256xf32, #tpu.memory_space<vmem>>, vector<1x3x256xf32>
    %126 = vector.shape_cast %125 : vector<1x3x256xf32> to vector<3x256xf32>
    %127 = vector.shape_cast %124 : vector<3x256xf32> to vector<1x3x256xf32>
    tpu.vector_store %arg3[%c0_24, %c0_25, %c0_26], %127 {strides = array<i32>} : memref<1x3x256xf32, #tpu.memory_space<vmem>>, vector<1x3x256xf32>,
    return
  }
  func.func @transform_0(%arg0: i32) -> (i32, i32) {
    %c0_i32 = arith.constant 0 : i32
    %c0_i32_0 = arith.constant 0 : i32
    %c0_i32_1 = arith.constant 0 : i32
    return %c0_i32, %c0_i32_0 : i32, i32
  }
  func.func @transform_1(%arg0: i32) -> (i32, i32, i32) {
    %c0_i32 = arith.constant 0 : i32
    %c0_i32_0 = arith.constant 0 : i32
    %c0_i32_1 = arith.constant 0 : i32
    return %arg0, %c0_i32, %c0_i32_0 : i32, i32, i32
  }
  func.func @transform_2(%arg0: i32) -> (i32, i32, i32) {
    %c0_i32 = arith.constant 0 : i32
    %c0_i32_0 = arith.constant 0 : i32
    %c0_i32_1 = arith.constant 0 : i32
    return %arg0, %c0_i32, %c0_i32_0 : i32, i32, i32
  }
}

</mosaic_0001>

<llo_original>
// kernel: preprocess_batch.1
$region0: #{preprocess_batch.1}
  #allocation0 [shape = 'u32[]', space=smem, size = 0x4, offset = 0x4, fixed_abs, tag = 'smem constant byte address 0x4 - core index']
  #allocation1 [shape = 'u32[72,128]{1,0:T(1,128)}', space=vmem, size = 0x9000, scoped, tag = 'internal scratch']
  %s0 = inlined_call_operand.vmem [shape: f32[8,12], index: 0, kind: input, shape index: {}]
  %s1 = inlined_call_operand.vmem [shape: f32[8,3,256], index: 1, kind: input, shape index: {}]
  %s2 = inlined_call_operand.vmem [shape: f32[8,3,256], index: 2, kind: output, shape index: {}]
  %s3 = sld [smem:[#allocation0]]
  $region45: #{preprocess_batch.1} parent=0
    _
  %s5 = ssub.s32 1, %s3
  %s6 = scalar_select 0, %s5, %s3
  $region1: #{preprocess_batch.1} parent=0
    #allocation2 [shape = 'u8[4096]{0}', space=smem, size = 0x1000, scoped, tag = 'input window, operand 0, single buffered']
    #allocation3 [shape = 's32[2]{0}', space=sflag, size = 0x8, scoped, tag = 'scoped memory for preprocess_batch.1']
    %7 = vsyncpa [#allocation3], 0
    loop: start=0, step=1, limit=10
    $region2: #{preprocess_batch.1} parent=1 // loop_pre_header
      _
    $region3: #{preprocess_batch.1} parent=1 // loop_header
      %s9 = sphi 0, %s13
      %p10 = scmp.ge.s32.totalorder %s9, 10
      %s17 = sphi 0, %s17
      %s19 = sphi 0, %s17
      %s20 = sphi 0, %s19
      %s34 = sphi 0, %s20
      %s40 = sphi 0, %s42
      %s43 = sphi 0, %s40
      %s44 = sphi 0, %s43
      %s60 = sphi 0, %s44
      %s66 = sphi 0, %s68
      %s69 = sphi 0, %s66
      %s70 = sphi 0, %s69
      %s86 = sphi 0, %s70
    $region4: #{preprocess_batch.1} parent=1 // loop_header_branch
      %12 = sbr.rel (%p10) target = $region8
    $region5: #{preprocess_batch.1} parent=1 // loop_body
      %s14 = ssub.s32 %s9, 1
      %s15 = ssub.s32 %s9, 2
      %s16 = sadd.s32 %s9, 1
      %s18 = sadd.s32 %s17, 1
      %p21 = scmp.eq.s32.totalorder %s9, 7
      %p22 = scmp.ne.s32.totalorder %s17, %s19
      %p23 = scmp.eq.s32.totalorder %s9, 0
      %p24 = por %p22, %p23
      %p25 = scmp.ne.s32.totalorder %s17, %s19
      %p26 = scmp.eq.s32.totalorder %s14, 7
      %p27 = por %p25, %p26
      %p28 = scmp.ne.s32.totalorder %s19, %s20
      %p29 = scmp.eq.s32.totalorder %s14, 0
      %p30 = por %p28, %p29
      %p31 = scmp.ne.s32.totalorder %s19, %s20
      %p32 = scmp.eq.s32.totalorder %s15, 7
      %p33 = por %p31, %p32
      %p35 = scmp.ne.s32.totalorder %s20, %s34
      %p36 = scmp.eq.s32.totalorder %s15, 0
      %p37 = por %p35, %p36
      %s38 = ssub.s32 %s9, %s16
      %p39 = scmp.eq.s32.totalorder %s38, 0
      %s41 = sadd.s32 %s40, 1
      %s42 = scalar_select %p39, %s40, %s41
      %p45 = pneg %p39
      %p46 = scmp.eq.s32.totalorder %s9, 7
      %p47 = por %p45, %p46
      %p48 = scmp.ne.s32.totalorder %s40, %s43
      %p49 = scmp.eq.s32.totalorder %s9, 0
      %p50 = por %p48, %p49
      %p51 = scmp.ne.s32.totalorder %s40, %s43
      %p52 = scmp.eq.s32.totalorder %s14, 7
      %p53 = por %p51, %p52
      %p54 = scmp.ne.s32.totalorder %s43, %s44
      %p55 = scmp.eq.s32.totalorder %s14, 0
      %p56 = por %p54, %p55
      %p57 = scmp.ne.s32.totalorder %s43, %s44
      %p58 = scmp.eq.s32.totalorder %s15, 7
      %p59 = por %p57, %p58
      %p61 = scmp.ne.s32.totalorder %s44, %s60
      %p62 = scmp.eq.s32.totalorder %s15, 0
      %p63 = por %p61, %p62
      %s64 = ssub.s32 %s9, %s16
      %p65 = scmp.eq.s32.totalorder %s64, 0
      %s67 = sadd.s32 %s66, 1
      %s68 = scalar_select %p65, %s66, %s67
      %p71 = pneg %p65
      %p72 = scmp.eq.s32.totalorder %s9, 7
      %p73 = por %p71, %p72
      %p74 = scmp.ne.s32.totalorder %s66, %s69
      %p75 = scmp.eq.s32.totalorder %s9, 0
      %p76 = por %p74, %p75
      %p77 = scmp.ne.s32.totalorder %s66, %s69
      %p78 = scmp.eq.s32.totalorder %s14, 7
      %p79 = por %p77, %p78
      %p80 = scmp.ne.s32.totalorder %s69, %s70
      %p81 = scmp.eq.s32.totalorder %s14, 0
      %p82 = por %p80, %p81
      %p83 = scmp.ne.s32.totalorder %s69, %s70
      %p84 = scmp.eq.s32.totalorder %s15, 7
      %p85 = por %p83, %p84
      %p87 = scmp.ne.s32.totalorder %s70, %s86
      %p88 = scmp.eq.s32.totalorder %s15, 0
      %p89 = por %p87, %p88
      %p90 = scmp.le.s32.totalorder 1, %s9
      %p91 = scmp.lt.s32.totalorder %s9, 9
      %p92 = pnand %p90, %p91
      %p93 = pneg %p92
      // Predicated region
      $region9: #{preprocess_batch.1} parent=5 // pred_check
        _
      $region10: #{preprocess_batch.1} parent=5 // pred_check_branch
        %95 = sbr.rel (%p92) target = $region12
      $region11: #{preprocess_batch.1} parent=5 // pred_region
        %s96 = ssub.s32 %s9, 1
        // Predicated region
        $region13: #{preprocess_batch.1} parent=11 // pred_check
          %p97 = pneg %p30
        $region14: #{preprocess_batch.1} parent=11 // pred_check_branch
          %99 = sbr.rel (%p97) target = $region16
        $region15: #{preprocess_batch.1} parent=11 // pred_region
          %101 = vsyncadd [#allocation3], 0
          %s103 = sshll.u32 %s0, 4
          %s104 = int_to_ptr.vmem [resolvable:$true] %s103
          %106 = dma.vmem_to_smem %s104, 128, [#allocation2], [#allocation3]
        $region16: #{preprocess_batch.1} parent=11 // pred_fallthru
          _
      $region12: #{preprocess_batch.1} parent=5 // pred_fallthru
        _
      %p107 = scmp.lt.s32.totalorder %s9, 8
      // Predicated region
      $region17: #{preprocess_batch.1} parent=5 // pred_check
        %p108 = pneg %p107
      $region18: #{preprocess_batch.1} parent=5 // pred_check_branch
        %110 = sbr.rel (%p108) target = $region20
      $region19: #{preprocess_batch.1} parent=5 // pred_region
        // Predicated region
        $region21: #{preprocess_batch.1} parent=19 // pred_check
          %p111 = pneg %p50
        $region22: #{preprocess_batch.1} parent=19 // pred_check_branch
          %113 = sbr.rel (%p111) target = $region24
        $region23: #{preprocess_batch.1} parent=19 // pred_region
          %p114 = scmp.lt.s32.totalorder %s9, 7
          %s115 = scalar_select %p114, %s9, 7
          %s116 = smul.addr %s115, 2
          %s117 = smul.addr %s116, 4
          %s118 = scalar_lea.vmem %s1, %s117
        $region24: #{preprocess_batch.1} parent=19 // pred_fallthru
          _
      $region20: #{preprocess_batch.1} parent=5 // pred_fallthru
        _
      %p119 = scmp.le.s32.totalorder 1, %s9
      %p120 = scmp.lt.s32.totalorder %s9, 9
      %p121 = pnand %p119, %p120
      %p122 = pneg %p121
      // Predicated region
      $region25: #{preprocess_batch.1} parent=5 // pred_check
        _
      $region26: #{preprocess_batch.1} parent=5 // pred_check_branch
        %124 = sbr.rel (%p121) target = $region28
      $region27: #{preprocess_batch.1} parent=5 // pred_region
        %s125 = ssub.s32 %s9, 1
        // Predicated region
        $region29: #{preprocess_batch.1} parent=27 // pred_check
          %p126 = pneg %p30
        $region30: #{preprocess_batch.1} parent=27 // pred_check_branch
          %128 = sbr.rel (%p126) target = $region32
        $region31: #{preprocess_batch.1} parent=27 // pred_region
          %130 = dma.done [#allocation3], 128
        $region32: #{preprocess_batch.1} parent=27 // pred_fallthru
          _
        %131 = sfence
        %p132 = pneg %p30
        %p133 = pneg %p27
        %p134 = scmp.lt.s32.totalorder %s14, 7
        %s135 = scalar_select %p134, %s14, 7
        %s136 = smul.addr %s135, 2
        %s137 = smul.addr %s136, 4
        %s138 = scalar_lea.vmem %s1, %s137
        %p139 = pneg %p56
        %p140 = pneg %p53
        %p141 = pneg %p82
        %p142 = pneg %p79
        %p143 = scmp.lt.s32.totalorder %s14, 7
        %s144 = scalar_select %p143, %s14, 7
        %s145 = smul.addr %s144, 2
        %s146 = smul.addr %s145, 4
        %s147 = scalar_lea.vmem %s2, %s146
        %p148 = scmp.lt.s32.totalorder %s14, 7
        %s149 = scalar_select %p148, %s14, 7
        %s150 = smul.addr %s149, 2
        %s151 = smul.addr %s150, 4
        %s152 = scalar_lea.vmem %s1, %s151
        %p153 = scmp.lt.s32.totalorder %s14, 7
        %s154 = scalar_select %p153, %s14, 7
        %s155 = smul.addr %s154, 2
        %s156 = smul.addr %s155, 4
        %s157 = scalar_lea.vmem %s2, %s156
        %v158 = vld [vmem:[%s152] sm:$0x77]
        %s159 = smul.u32 %s14, 128
        %s160 = sld [smem:[#allocation2 + %s159]]
        %s161 = sadd.s32 %s159, 1
        %s162 = sld [smem:[#allocation2 + %s161]]
        %s163 = sadd.s32 %s159, 2
        %s164 = sld [smem:[#allocation2 + %s163]]
        %v165 = vstv %s160
        %v166 = vmul.f32 %v158, %v165
        %v167 = vmax.f32 %v166, 0.0
        %v168 = vmin.f32 %v167, 1.0
        %v169 = vmul.f32 %v168, 0.2989
        %v170 = vmul.f32 %v168, 0.587
        %v172 = vrot.slane %v170, 5
        %v173 = vrot.slane %v172, 4
        %v175 = vadd.f32 %v169, %v173
        %v176 = vmul.f32 %v168, 0.114
        %v178 = vrot.slane %v176, 6
        %v179 = vrot.slane %v178, 4
        %v181 = vadd.f32 %v175, %v179
        %v182 = vstv %s162
        %v183 = vmul.f32 %v182, %v168
        %s184 = ssub.f32 1.0, %s162
        %v186 = vperm.slane %v181, 0
        %v187 = vperm.slane %v181, 4
        %vm190 = vcmask 1040384
        %v191 = vsel %vm190, %v186, 0.0
        %v192 = vsel %vm190, %v187, 0.0
        %v193 = vadd.f32 %v191, %v192
        %194 = vadd.xlane.f32.xlu0 %v193
        %v195 = vpop.xlane.xlu0 %194
        %v196 = vrot.slane %v195, 4
        %v197 = vadd.f32 %v195, %v196
        %v198 = vrot.slane %v197, 2
        %v199 = vadd.f32 %v197, %v198
        %v200 = vrot.slane %v199, 1
        %v201 = vadd.f32 %v199, %v200
        %s202 = vtos %v201
        %v203 = vrcp.pop 256.0
        %v204 = vmul.f32 256.0, %v203
        %v205 = vsub.f32 1.0, %v204
        %v206 = vmul.f32 %v203, %v205
        %v207 = vadd.f32 %v203, %v206
        %vm208 = vweird.f32 %v203
        %v209 = vsel %vm208, %v203, %v207
        %s210 = vtos %v209
        %s211 = smul.f32 %s202, %s210
        %s212 = smul.f32 %s184, %s211
        %v213 = vstv %s212
        %v214 = vadd.f32 %v183, %v213
        %v215 = vmax.f32 %v214, 0.0
        %v216 = vmin.f32 %v215, 1.0
        %v217 = vmul.f32 %v216, 0.2989
        %v218 = vmul.f32 %v216, 0.587
        %v220 = vrot.slane %v218, 5
        %v221 = vrot.slane %v220, 4
        %v223 = vadd.f32 %v217, %v221
        %v224 = vmul.f32 %v216, 0.114
        %v226 = vrot.slane %v224, 6
        %v227 = vrot.slane %v226, 4
        %v229 = vadd.f32 %v223, %v227
        %v230 = vstv %s164
        %v231 = vmul.f32 %v230, %v216
        %s232 = ssub.f32 1.0, %s164
        %v233 = vstv %s232
        %v234 = vmul.f32 %v233, %v229
        %v236 = vperm.slane %v234, 0
        %v237 = vperm.slane %v234, 4
        %v240 = vperm.slane %v236, 0
        %v241 = vperm.slane %v237, 0
        %v244 = vrot.slane %v241, 4
        %vm245 = vcmask 1043456
        %v246 = vsel %vm245, %v240, %v244
        %v248 = vadd.f32 %v231, %v246
        %v249 = vmax.f32 %v248, 0.0
        %v250 = vmin.f32 %v249, 1.0
        %252 = vst [vmem:[#allocation1] ss:$2 sm:$0xff] %v250
        %v253 = vld.sshfl [vmem:[#allocation1] sm:$0xff pattern:$0x75316420]
        %v254 = vld.sshfl [vmem:[#allocation1 + $0x8] sm:$0xff pattern:$0x75316420]
        %257 = vrot.lane.b32.xlu0 %v253, 16
        %v258 = vpop.permute.xlu0 %257
        %259 = vrot.lane.b32.xlu0 %v254, 16
        %v260 = vpop.permute.xlu0 %259
        %v261 = vlaneseq
        %v262 = vand.u32 %v261, 127
        %vm263 = vcmp.lt.s32.totalorder %v262, 16
        %v264 = vsel %vm263, %v258, %v260
        %v265 = vsel %vm263, %v260, %v258
        %266 = vst [vmem:[#allocation1] ss:$2 sm:$0xff] %v250
        %v267 = vld.sshfl [vmem:[#allocation1] sm:$0xff pattern:$0x75316420]
        %v268 = vld.sshfl [vmem:[#allocation1 + $0x8] sm:$0xff pattern:$0x75316420]
        %271 = vrot.lane.b32.xlu0 %v267, 112
        %v272 = vpop.permute.xlu0 %271
        %273 = vrot.lane.b32.xlu0 %v268, 112
        %v274 = vpop.permute.xlu0 %273
        %vm275 = vcmp.lt.s32.totalorder %v262, 112
        %v276 = vsel %vm275, %v272, %v274
        %v277 = vsel %vm275, %v274, %v272
        %v278 = vadd.s32 %v262, 128
        %vm279 = vcmp.lt.s32.totalorder %v278, 16
        %v280 = vsel %vm263, %v276, %v265
        %v281 = vsel %vm279, %v277, %v264
        %vm282 = vcmp.ge.s32.totalorder %v262, 240
        %vm283 = vcmp.ge.s32.totalorder %v278, 240
        %v284 = vsel %vm282, %v265, %v276
        %v285 = vsel %vm283, %v264, %v277
        %v286 = vlaneseq
        %v287 = vshrl.u32 %v286, 7
        %vm288 = vcmp.eq.s32.totalorder %v287, 0
        %s289 = sadd.s32 %s159, 3
        %s290 = sld [smem:[#allocation2 + %s289]]
        %vm291 = vcmp.eq.s32.totalorder %v287, 1
        %s292 = sadd.s32 %s159, 4
        %s293 = sld [smem:[#allocation2 + %s292]]
        %s294 = sadd.s32 %s159, 5
        %s295 = sld [smem:[#allocation2 + %s294]]
        %v296 = vstv %s293
        %v297 = vstv %s295
        %v298 = vsel %vm291, %v296, %v297
        %v299 = vstv %s290
        %v300 = vsel %vm288, %v299, %v298
        %s301 = sadd.s32 %s159, 6
        %s302 = sld [smem:[#allocation2 + %s301]]
        %s303 = sadd.s32 %s159, 7
        %s304 = sld [smem:[#allocation2 + %s303]]
        %s305 = sadd.s32 %s159, 8
        %s306 = sld [smem:[#allocation2 + %s305]]
        %v307 = vstv %s304
        %v308 = vstv %s306
        %v309 = vsel %vm291, %v307, %v308
        %v310 = vstv %s302
        %v311 = vsel %vm288, %v310, %v309
        %s312 = sadd.s32 %s159, 9
        %s313 = sld [smem:[#allocation2 + %s312]]
        %s314 = sadd.s32 %s159, 10
        %s315 = sld [smem:[#allocation2 + %s314]]
        %s316 = sadd.s32 %s159, 11
        %s317 = sld [smem:[#allocation2 + %s316]]
        %v318 = vstv %s315
        %v319 = vstv %s317
        %v320 = vsel %vm291, %v318, %v319
        %v321 = vstv %s313
        %v322 = vsel %vm288, %v321, %v320
        %v323 = vadd.f32 %v280, %v284
        %v324 = vadd.f32 %v281, %v285
        %v325 = vmul.f32 %v300, %v323
        %v326 = vmul.f32 %v300, %v324
        %327 = vst [vmem:[#allocation1] ss:$2 sm:$0xff] %v250
        %v328 = vld.sshfl [vmem:[#allocation1] sm:$0xff pattern:$0x75316420]
        %v329 = vld.sshfl [vmem:[#allocation1 + $0x8] sm:$0xff pattern:$0x75316420]
        %v332 = vmul.f32 %v311, %v328
        %v333 = vmul.f32 %v311, %v329
        %v334 = vadd.f32 %v325, %v332
        %v335 = vadd.f32 %v326, %v333
        %v336 = vsub.f32 %v334, %v322
        %v337 = vsub.f32 %v335, %v322
        %v340 = vrot.slane %v337, 4
        %v341 = vsel %vm245, %v336, %v340
        %343 = vst [vmem:[%s157] sm:$0x77] %v341
        %p344 = scmp.lt.s32.totalorder %s14, 7
        %s345 = scalar_select %p344, %s14, 7
        %s346 = smul.addr %s345, 2
        %s347 = smul.addr %s346, 4
        %s348 = scalar_lea.vmem %s2, %s347
        // Predicated region
        $region33: #{preprocess_batch.1} parent=27 // pred_check
          %p349 = pneg %p79
        $region34: #{preprocess_batch.1} parent=27 // pred_check_branch
          %351 = sbr.rel (%p349) target = $region36
        $region35: #{preprocess_batch.1} parent=27 // pred_region
          _
        $region36: #{preprocess_batch.1} parent=27 // pred_fallthru
          _
      $region28: #{preprocess_batch.1} parent=5 // pred_fallthru
        _
      %p352 = scmp.le.s32.totalorder 2, %s9
      // Predicated region
      $region37: #{preprocess_batch.1} parent=5 // pred_check
        %p353 = pneg %p352
      $region38: #{preprocess_batch.1} parent=5 // pred_check_branch
        %355 = sbr.rel (%p353) target = $region40
      $region39: #{preprocess_batch.1} parent=5 // pred_region
        %s356 = ssub.s32 %s9, 2
        // Predicated region
        $region41: #{preprocess_batch.1} parent=39 // pred_check
          %p357 = pneg %p85
        $region42: #{preprocess_batch.1} parent=39 // pred_check_branch
          %359 = sbr.rel (%p357) target = $region44
        $region43: #{preprocess_batch.1} parent=39 // pred_region
          %p360 = scmp.lt.s32.totalorder %s15, 7
          %s361 = scalar_select %p360, %s15, 7
          %s362 = smul.addr %s361, 2
          %s363 = smul.addr %s362, 4
          %s364 = scalar_lea.vmem %s2, %s363
        $region44: #{preprocess_batch.1} parent=39 // pred_fallthru
          _
      $region40: #{preprocess_batch.1} parent=5 // pred_fallthru
        _
    $region6: #{preprocess_batch.1} parent=1 // loop_footer
      %s13 = sadd.s32 1, %s9
    $region7: #{preprocess_batch.1} parent=1 // loop_footer_branch
      %8 = sbr.rel target = $region3
    $region8: #{preprocess_batch.1} parent=1 // loop_exit
      _
    %365 = vsyncpa [#allocation3], 1
    %s366 = scalar_lea.sflag [#allocation3], 1
    %367 = vsyncpa %s366, 1

</llo_original>
